<compile_context>
chip_gen: v5e
topology: v5e:2x2
jax: 0.10.0
libtpu: 0.0.40
codegen_flags: <defaults>
</compile_context>

<pallas_src>
import math
import numpy as np
import jax
import jax.numpy as jnp
from jax.experimental import pallas as pl
from jax.experimental.pallas import tpu as pltpu


def _gelu_tanh(v):
    # exactly the op sequence in the PyTorch forward
    return (v * 0.5) * (jnp.tanh((v + (v * v * v) * 0.044715) * 0.7978845608028654) + 1.0)


# -----------------------------------------------------------------------------
# Fused kernel: conv1(+bias) + GELU + convT(+bias) + GELU, all resident in VMEM.
# -----------------------------------------------------------------------------
def _fused_kernel(xph_ref, w1g_ref, w2t_ref, b2_ref, mask_ref,
                  v10_ref, pre_ref, z_ref):
    f32 = jnp.float32

    # ---- Conv2d(6,16,6,stride=3,pad=2) + bias -------------------------------
    # xph rows 0..53: stride-3 phase relayout of the padded input, row 54: ones
    # (bias column folded into tap group 0).  Output column o = 12*oy + ox;
    # columns with o % 12 == 11 are junk and get sliced away in the wrapper.
    v1 = jnp.dot(w1g_ref[0], xph_ref[:, 0:132], preferred_element_type=f32)
    v1 = v1 + jnp.dot(w1g_ref[1], xph_ref[:, 1:133], preferred_element_type=f32)
    v1 = v1 + jnp.dot(w1g_ref[2], xph_ref[:, 12:144], preferred_element_type=f32)
    v1 = v1 + jnp.dot(w1g_ref[3], xph_ref[:, 13:145], preferred_element_type=f32)
    g1 = _gelu_tanh(v1)                           # (16, 132)
    v10_ref[...] = g1

    # ---- zero-padded stride-12 buffer of gelu(v1) for the convT taps --------
    # z[:, 12a+b] = gelu(v1)[a-1, b-1] for 1<=a<=11, 1<=b<=11, else 0.
    z_ref[...] = jnp.zeros_like(z_ref)
    z_ref[:, 13:145] = g1 * mask_ref[...]         # junk columns (o%12==11) zeroed

    # ---- ConvTranspose2d(16,8,4,stride=2): 4 taps x 4 output parities -------
    # pre row = 8*(2*py+px) + cout, column = 12*r + s  ->  out[co, 2r+py, 2s+px]
    pre = jnp.dot(w2t_ref[0], z_ref[:, 0:144], preferred_element_type=f32)
    pre = pre + jnp.dot(w2t_ref[1], z_ref[:, 1:145], preferred_element_type=f32)
    pre = pre + jnp.dot(w2t_ref[2], z_ref[:, 12:156], preferred_element_type=f32)
    pre = pre + jnp.dot(w2t_ref[3], z_ref[:, 13:157], preferred_element_type=f32)
    pre_ref[...] = _gelu_tanh(pre + b2_ref[...])  # (32, 144)


def _fused_call(xph, w1g, w2t, b2c, mask):
    return pl.pallas_call(
        _fused_kernel,
        out_shape=(jax.ShapeDtypeStruct((16, 132), jnp.float32),   # gelu(conv1)
                   jax.ShapeDtypeStruct((32, 144), jnp.float32)),  # gelu(convT), parity-major
        scratch_shapes=[pltpu.VMEM((16, 160), jnp.float32)],       # zero-padded g1 buffer
        compiler_params=pltpu.CompilerParams(
            # let XLA fuse the pad + phase-relayout producer of xph into the
            # kernel's input copy; the packed weights are plain parameters.
            allow_input_fusion=[True, False, False, False, False]),
    )(xph, w1g, w2t, b2c, mask)


# -----------------------------------------------------------------------------
# Wrapper: input phase re-layout going in, free reshapes/transposes coming out.
# -----------------------------------------------------------------------------
def model_forward(x0, packed):
    w1g, w2t, b2c, mask = packed
    xpad = jnp.pad(x0[0], ((0, 0), (2, 2), (2, 2)))                   # (6, 36, 36)
    # xph[9c+3bh+bw, 12u+v] = xpad[c, 3u+bh, 3v+bw]
    xph = xpad.reshape(6, 12, 3, 12, 3).transpose(0, 2, 4, 1, 3).reshape(54, 144)
    xph = jnp.pad(xph, ((0, 0), (0, 1)))                              # (54, 145)
    xph = jnp.concatenate([xph, jnp.ones((1, 145), xph.dtype)], axis=0)  # ones row -> bias

    g1, pre = _fused_call(xph, w1g, w2t, b2c, mask)

    # v10: drop the junk every-12th column
    v10 = g1.reshape(1, 16, 11, 12)[:, :, :, :11]                     # (1, 16, 11, 11)
    # v30: interleave the 4 output parities (tiny transpose, free in XLA)
    v30 = (pre.reshape(2, 2, 8, 12, 12)     # (py, px, co, r, s)
              .transpose(2, 3, 0, 4, 1)     # (co, r, py, s, px)
              .reshape(1, 8, 24, 24))
    return v10, v30


# -----------------------------------------------------------------------------
# Parameter init (module shapes) + one-time repacking into kernel layouts.
# -----------------------------------------------------------------------------
def init_params(key):
    k1, k2, k3, k4 = jax.random.split(key, 4)
    fan_in1 = 6 * 6 * 6
    bnd1 = 1.0 / math.sqrt(fan_in1)
    w1 = jax.random.uniform(k1, (16, 6, 6, 6), jnp.float32, -bnd1, bnd1)
    b1 = jax.random.uniform(k2, (16,), jnp.float32, -bnd1, bnd1)
    fan_in2 = 16 * 4 * 4
    bnd2 = 1.0 / math.sqrt(fan_in2)
    wt2 = jax.random.uniform(k3, (16, 8, 4, 4), jnp.float32, -bnd2, bnd2)
    bt2 = jax.random.uniform(k4, (8,), jnp.float32, -bnd2, bnd2)
    return w1, b1, wt2, bt2


def pack_params(w1, b1, wt2, bt2):
    w1 = np.asarray(w1, np.float32)        # (16, 6, 6, 6)  OIHW
    b1 = np.asarray(b1, np.float32)        # (16,)
    wt2 = np.asarray(wt2, np.float32)      # (16, 8, 4, 4)  (Cin, Cout, KH, KW)
    bt2 = np.asarray(bt2, np.float32)      # (8,)

    # conv1 phase weights: w1g[2ah+aw, co, 9c+3bh+bw] = w1[co, c, 3ah+bh, 3aw+bw]
    w1g = (w1.reshape(16, 6, 2, 3, 2, 3)
             .transpose(2, 4, 0, 1, 3, 5)
             .reshape(4, 16, 54))
    # append bias column (paired with the ones row of xph); only group 0 carries it
    w1g_ext = np.zeros((4, 16, 55), np.float32)
    w1g_ext[:, :, :54] = w1g
    w1g_ext[0, :, 54] = b1

    # convT tap weights: w2t[2dr+ds, 8*(2py+px)+co, ci]
    #                      = wt2[ci, co, py + 2*(1-dr), px + 2*(1-ds)]
    t = wt2.reshape(16, 8, 2, 2, 2, 2).transpose(2, 4, 3, 5, 1, 0)   # (khh,kwh,py,px,co,ci)
    w2t = np.ascontiguousarray(t[::-1, ::-1]).reshape(4, 32, 16)

    # convT bias, replicated per output parity: row 8*p + co -> bt2[co]
    b2c = np.tile(bt2.reshape(1, 8), (4, 1)).reshape(32, 1)

    # mask that zeroes the junk columns (o % 12 == 11) of gelu(conv1)
    mask = np.ones((1, 132), np.float32)
    mask[0, 11::12] = 0.0

    return (jnp.asarray(w1g_ext), jnp.asarray(w2t),
            jnp.asarray(b2c), jnp.asarray(mask))


# -----------------------------------------------------------------------------
# Pure-XLA reference (sanity check only).
# -----------------------------------------------------------------------------
def reference_forward(x0, w1, b1, wt2, bt2):
    hp = jax.lax.Precision.HIGHEST
    v1 = jax.lax.conv_general_dilated(
        x0, w1, window_strides=(3, 3), padding=((2, 2), (2, 2)),
        dimension_numbers=("NCHW", "OIHW", "NCHW"), precision=hp)
    v10 = _gelu_tanh(v1 + b1.reshape(1, 16, 1, 1))
    w2eq = jnp.flip(wt2, (2, 3)).transpose(1, 0, 2, 3)        # (8, 16, 4, 4) OIHW
    v21 = jax.lax.conv_general_dilated(
        v10, w2eq, window_strides=(1, 1), padding=((3, 3), (3, 3)),
        lhs_dilation=(2, 2), dimension_numbers=("NCHW", "OIHW", "NCHW"),
        precision=hp)
    return v10, _gelu_tanh(v21 + bt2.reshape(1, 8, 1, 1))


if __name__ == "__main__":
    key = jax.random.PRNGKey(0)
    kx, kp = jax.random.split(key)
    x0 = jax.random.normal(kx, (1, 6, 32, 32), jnp.float32)
    raw = init_params(kp)
    packed = pack_params(*raw)

    fwd = jax.jit(model_forward)
    v10, v30 = fwd(x0, packed)
    jax.block_until_ready((v10, v30))

    assert v10.shape == (1, 16, 11, 11), v10.shape
    assert v30.shape == (1, 8, 24, 24), v30.shape
    assert bool(jnp.isfinite(v10).all()) and bool(jnp.isfinite(v30).all())

    ref10, ref30 = reference_forward(x0, *raw)
    assert bool(jnp.allclose(v10, ref10, rtol=1e-2, atol=1e-2)), \
        float(jnp.max(jnp.abs(v10 - ref10)))
    assert bool(jnp.allclose(v30, ref30, rtol=1e-2, atol=1e-2)), \
        float(jnp.max(jnp.abs(v30 - ref30)))
    print("KERNEL_OK")
</pallas_src>

<mosaic_0001>
module attributes {stable_mosaic.version = 11 : i64} {
  func.func @_fused_kernel(%arg0: memref<55x145xf32, #tpu.memory_space<vmem>>, %arg1: memref<4x16x55xf32, #tpu.memory_space<vmem>>, %arg2: memref<4x32x16xf32, #tpu.memory_space<vmem>>, %arg3: memref<32x1xf32, #tpu.memory_space<vmem>>, %arg4: memref<1x132xf32, #tpu.memory_space<vmem>>, %arg5: memref<16x132xf32, #tpu.memory_space<vmem>>, %arg6: memref<32x144xf32, #tpu.memory_space<vmem>>, %arg7: memref<16x160xf32, #tpu.memory_space<vmem>>) attributes {dimension_semantics = [], scalar_prefetch = 0 : i64, scratch_operands = 1 : i64, tpu.core_type = #tpu.core_type<tc>} {
    %c0 = arith.constant 0 : index
    %c0_0 = arith.constant 0 : index
    %c0_1 = arith.constant 0 : index
    %0 = vector.load %arg1[%c0, %c0_0, %c0_1] : memref<4x16x55xf32, #tpu.memory_space<vmem>>, vector<1x16x55xf32>
    %1 = vector.shape_cast %0 : vector<1x16x55xf32> to vector<16x55xf32>
    %c0_2 = arith.constant 0 : index
    %c0_3 = arith.constant 0 : index
    %2 = vector.load %arg0[%c0_2, %c0_3] : memref<55x145xf32, #tpu.memory_space<vmem>>, vector<55x132xf32>
    %cst = arith.constant dense<0.000000e+00> : vector<16x132xf32>
    %3 = tpu.matmul %1, %2, %cst {dimension_numbers = #tpu.dot_dimension_numbers<[1], [0], [0], [1], [0, 0, 1, 1], [], []>} : vector<16x55xf32>, vector<55x132xf32>, vector<16x132xf32> -> vector<16x132xf32>
    %c1 = arith.constant 1 : index
    %c0_4 = arith.constant 0 : index
    %c0_5 = arith.constant 0 : index
    %4 = vector.load %arg1[%c1, %c0_4, %c0_5] : memref<4x16x55xf32, #tpu.memory_space<vmem>>, vector<1x16x55xf32>
    %5 = vector.shape_cast %4 : vector<1x16x55xf32> to vector<16x55xf32>
    %c0_6 = arith.constant 0 : index
    %c1_7 = arith.constant 1 : index
    %6 = vector.load %arg0[%c0_6, %c1_7] : memref<55x145xf32, #tpu.memory_space<vmem>>, vector<55x132xf32>
    %cst_8 = arith.constant dense<0.000000e+00> : vector<16x132xf32>
    %7 = tpu.matmul %5, %6, %cst_8 {dimension_numbers = #tpu.dot_dimension_numbers<[1], [0], [0], [1], [0, 0, 1, 1], [], []>} : vector<16x55xf32>, vector<55x132xf32>, vector<16x132xf32> -> vector<16x132xf32>
    %8 = arith.addf %3, %7 : vector<16x132xf32>
    %c2 = arith.constant 2 : index
    %c0_9 = arith.constant 0 : index
    %c0_10 = arith.constant 0 : index
    %9 = vector.load %arg1[%c2, %c0_9, %c0_10] : memref<4x16x55xf32, #tpu.memory_space<vmem>>, vector<1x16x55xf32>
    %10 = vector.shape_cast %9 : vector<1x16x55xf32> to vector<16x55xf32>
    %c0_11 = arith.constant 0 : index
    %c12 = arith.constant 12 : index
    %11 = vector.load %arg0[%c0_11, %c12] : memref<55x145xf32, #tpu.memory_space<vmem>>, vector<55x132xf32>
    %cst_12 = arith.constant dense<0.000000e+00> : vector<16x132xf32>
    %12 = tpu.matmul %10, %11, %cst_12 {dimension_numbers = #tpu.dot_dimension_numbers<[1], [0], [0], [1], [0, 0, 1, 1], [], []>} : vector<16x55xf32>, vector<55x132xf32>, vector<16x132xf32> -> vector<16x132xf32>
    %13 = arith.addf %8, %12 : vector<16x132xf32>
    %c3 = arith.constant 3 : index
    %c0_13 = arith.constant 0 : index
    %c0_14 = arith.constant 0 : index
    %14 = vector.load %arg1[%c3, %c0_13, %c0_14] : memref<4x16x55xf32, #tpu.memory_space<vmem>>, vector<1x16x55xf32>
    %15 = vector.shape_cast %14 : vector<1x16x55xf32> to vector<16x55xf32>
    %c0_15 = arith.constant 0 : index
    %c13 = arith.constant 13 : index
    %16 = vector.load %arg0[%c0_15, %c13] : memref<55x145xf32, #tpu.memory_space<vmem>>, vector<55x132xf32>
    %cst_16 = arith.constant dense<0.000000e+00> : vector<16x132xf32>
    %17 = tpu.matmul %15, %16, %cst_16 {dimension_numbers = #tpu.dot_dimension_numbers<[1], [0], [0], [1], [0, 0, 1, 1], [], []>} : vector<16x55xf32>, vector<55x132xf32>, vector<16x132xf32> -> vector<16x132xf32>
    %18 = arith.addf %13, %17 : vector<16x132xf32>
    %cst_17 = arith.constant 5.000000e-01 : f32
    %19 = vector.broadcast %cst_17 : f32 to vector<16x132xf32>
    %20 = arith.mulf %18, %19 : vector<16x132xf32>
    %21 = arith.mulf %18, %18 : vector<16x132xf32>
    %22 = arith.mulf %21, %18 : vector<16x132xf32>
    %cst_18 = arith.constant 4.471500e-02 : f32
    %23 = vector.broadcast %cst_18 : f32 to vector<16x132xf32>
    %24 = arith.mulf %22, %23 : vector<16x132xf32>
    %25 = arith.addf %18, %24 : vector<16x132xf32>
    %cst_19 = arith.constant 0.797884583 : f32
    %26 = vector.broadcast %cst_19 : f32 to vector<16x132xf32>
    %27 = arith.mulf %25, %26 : vector<16x132xf32>
    %28 = math.tanh %27 : vector<16x132xf32>
    %cst_20 = arith.constant 1.000000e+00 : f32
    %29 = vector.broadcast %cst_20 : f32 to vector<16x132xf32>
    %30 = arith.addf %28, %29 : vector<16x132xf32>
    %31 = arith.mulf %20, %30 : vector<16x132xf32>
    %c0_21 = arith.constant 0 : index
    %c0_22 = arith.constant 0 : index
    %32 = vector.load %arg5[%c0_21, %c0_22] : memref<16x132xf32, #tpu.memory_space<vmem>>, vector<16x132xf32>
    tpu.vector_store %arg5[%c0_21, %c0_22], %31 {strides = array<i32>} : memref<16x132xf32, #tpu.memory_space<vmem>>, vector<16x132xf32>,
    %cst_23 = arith.constant 0.000000e+00 : f32
    %33 = vector.broadcast %cst_23 : f32 to vector<16x160xf32>
    %c0_24 = arith.constant 0 : index
    %c0_25 = arith.constant 0 : index
    %34 = vector.load %arg7[%c0_24, %c0_25] : memref<16x160xf32, #tpu.memory_space<vmem>>, vector<16x160xf32>
    tpu.vector_store %arg7[%c0_24, %c0_25], %33 {strides = array<i32>} : memref<16x160xf32, #tpu.memory_space<vmem>>, vector<16x160xf32>,
    %c0_26 = arith.constant 0 : index
    %c0_27 = arith.constant 0 : index
    %35 = vector.load %arg4[%c0_26, %c0_27] : memref<1x132xf32, #tpu.memory_space<vmem>>, vector<1x132xf32>
    %36 = vector.broadcast %35 : vector<1x132xf32> to vector<16x132xf32>
    %37 = arith.mulf %31, %36 : vector<16x132xf32>
    %c0_28 = arith.constant 0 : index
    %c13_29 = arith.constant 13 : index
    %38 = vector.load %arg7[%c0_28, %c13_29] : memref<16x160xf32, #tpu.memory_space<vmem>>, vector<16x132xf32>
    tpu.vector_store %arg7[%c0_28, %c13_29], %37 {strides = array<i32>} : memref<16x160xf32, #tpu.memory_space<vmem>>, vector<16x132xf32>,
    %c0_30 = arith.constant 0 : index
    %c0_31 = arith.constant 0 : index
    %c0_32 = arith.constant 0 : index
    %39 = vector.load %arg2[%c0_30, %c0_31, %c0_32] : memref<4x32x16xf32, #tpu.memory_space<vmem>>, vector<1x32x16xf32>
    %40 = vector.shape_cast %39 : vector<1x32x16xf32> to vector<32x16xf32>
    %c0_33 = arith.constant 0 : index
    %c0_34 = arith.constant 0 : index
    %41 = vector.load %arg7[%c0_33, %c0_34] : memref<16x160xf32, #tpu.memory_space<vmem>>, vector<16x144xf32>
    %cst_35 = arith.constant dense<0.000000e+00> : vector<32x144xf32>
    %42 = tpu.matmul %40, %41, %cst_35 {dimension_numbers = #tpu.dot_dimension_numbers<[1], [0], [0], [1], [0, 0, 1, 1], [], []>} : vector<32x16xf32>, vector<16x144xf32>, vector<32x144xf32> -> vector<32x144xf32>
    %c1_36 = arith.constant 1 : index
    %c0_37 = arith.constant 0 : index
    %c0_38 = arith.constant 0 : index
    %43 = vector.load %arg2[%c1_36, %c0_37, %c0_38] : memref<4x32x16xf32, #tpu.memory_space<vmem>>, vector<1x32x16xf32>
    %44 = vector.shape_cast %43 : vector<1x32x16xf32> to vector<32x16xf32>
    %c0_39 = arith.constant 0 : index
    %c1_40 = arith.constant 1 : index
    %45 = vector.load %arg7[%c0_39, %c1_40] : memref<16x160xf32, #tpu.memory_space<vmem>>, vector<16x144xf32>
    %cst_41 = arith.constant dense<0.000000e+00> : vector<32x144xf32>
    %46 = tpu.matmul %44, %45, %cst_41 {dimension_numbers = #tpu.dot_dimension_numbers<[1], [0], [0], [1], [0, 0, 1, 1], [], []>} : vector<32x16xf32>, vector<16x144xf32>, vector<32x144xf32> -> vector<32x144xf32>
    %47 = arith.addf %42, %46 : vector<32x144xf32>
    %c2_42 = arith.constant 2 : index
    %c0_43 = arith.constant 0 : index
    %c0_44 = arith.constant 0 : index
    %48 = vector.load %arg2[%c2_42, %c0_43, %c0_44] : memref<4x32x16xf32, #tpu.memory_space<vmem>>, vector<1x32x16xf32>
    %49 = vector.shape_cast %48 : vector<1x32x16xf32> to vector<32x16xf32>
    %c0_45 = arith.constant 0 : index
    %c12_46 = arith.constant 12 : index
    %50 = vector.load %arg7[%c0_45, %c12_46] : memref<16x160xf32, #tpu.memory_space<vmem>>, vector<16x144xf32>
    %cst_47 = arith.constant dense<0.000000e+00> : vector<32x144xf32>
    %51 = tpu.matmul %49, %50, %cst_47 {dimension_numbers = #tpu.dot_dimension_numbers<[1], [0], [0], [1], [0, 0, 1, 1], [], []>} : vector<32x16xf32>, vector<16x144xf32>, vector<32x144xf32> -> vector<32x144xf32>
    %52 = arith.addf %47, %51 : vector<32x144xf32>
    %c3_48 = arith.constant 3 : index
    %c0_49 = arith.constant 0 : index
    %c0_50 = arith.constant 0 : index
    %53 = vector.load %arg2[%c3_48, %c0_49, %c0_50] : memref<4x32x16xf32, #tpu.memory_space<vmem>>, vector<1x32x16xf32>
    %54 = vector.shape_cast %53 : vector<1x32x16xf32> to vector<32x16xf32>
    %c0_51 = arith.constant 0 : index
    %c13_52 = arith.constant 13 : index
    %55 = vector.load %arg7[%c0_51, %c13_52] : memref<16x160xf32, #tpu.memory_space<vmem>>, vector<16x144xf32>
    %cst_53 = arith.constant dense<0.000000e+00> : vector<32x144xf32>
    %56 = tpu.matmul %54, %55, %cst_53 {dimension_numbers = #tpu.dot_dimension_numbers<[1], [0], [0], [1], [0, 0, 1, 1], [], []>} : vector<32x16xf32>, vector<16x144xf32>, vector<32x144xf32> -> vector<32x144xf32>
    %57 = arith.addf %52, %56 : vector<32x144xf32>
    %c0_54 = arith.constant 0 : index
    %c0_55 = arith.constant 0 : index
    %58 = vector.load %arg3[%c0_54, %c0_55] : memref<32x1xf32, #tpu.memory_space<vmem>>, vector<32x1xf32>
    %59 = vector.broadcast %58 : vector<32x1xf32> to vector<32x144xf32>
    %60 = arith.addf %57, %59 : vector<32x144xf32>
    %cst_56 = arith.constant 5.000000e-01 : f32
    %61 = vector.broadcast %cst_56 : f32 to vector<32x144xf32>
    %62 = arith.mulf %60, %61 : vector<32x144xf32>
    %63 = arith.mulf %60, %60 : vector<32x144xf32>
    %64 = arith.mulf %63, %60 : vector<32x144xf32>
    %cst_57 = arith.constant 4.471500e-02 : f32
    %65 = vector.broadcast %cst_57 : f32 to vector<32x144xf32>
    %66 = arith.mulf %64, %65 : vector<32x144xf32>
    %67 = arith.addf %60, %66 : vector<32x144xf32>
    %cst_58 = arith.constant 0.797884583 : f32
    %68 = vector.broadcast %cst_58 : f32 to vector<32x144xf32>
    %69 = arith.mulf %67, %68 : vector<32x144xf32>
    %70 = math.tanh %69 : vector<32x144xf32>
    %cst_59 = arith.constant 1.000000e+00 : f32
    %71 = vector.broadcast %cst_59 : f32 to vector<32x144xf32>
    %72 = arith.addf %70, %71 : vector<32x144xf32>
    %73 = arith.mulf %62, %72 : vector<32x144xf32>
    %c0_60 = arith.constant 0 : index
    %c0_61 = arith.constant 0 : index
    %74 = vector.load %arg6[%c0_60, %c0_61] : memref<32x144xf32, #tpu.memory_space<vmem>>, vector<32x144xf32>
    tpu.vector_store %arg6[%c0_60, %c0_61], %73 {strides = array<i32>} : memref<32x144xf32, #tpu.memory_space<vmem>>, vector<32x144xf32>,
    return
  }
}

</mosaic_0001>

<llo_original>
// kernel: model_forward.2
$region0: #{model_forward.2}
  #allocation0 [shape = 'u32[]', space=smem, size = 0x4, offset = 0x4, fixed_abs, tag = 'smem constant byte address 0x4 - core index']
  #allocation1 [shape = 'u32[72,128]{1,0:T(1,128)}', space=vmem, size = 0x9000, scoped, tag = 'internal scratch']
  #allocation2 [shape = 'f32[16,160]{1,0:T(8,128)}', space=vmem, size = 0x4000, scoped, tag = 'scratch operand']
  #allocation3 [shape = 'u32[2048]{0}', space=vmem, size = 0x2000, scoped, tag = 'scoped memory for model_forward.2']
  #allocation4 [shape = 'u32[2048]{0}', space=vmem, size = 0x2000, scoped, tag = 'scoped memory for model_forward.2']
  #allocation5 [shape = 'u32[2048]{0}', space=vmem, size = 0x2000, scoped, tag = 'scoped memory for model_forward.2']
  #allocation6 [shape = 'u32[2048]{0}', space=vmem, size = 0x2000, scoped, tag = 'scoped memory for model_forward.2']
  #allocation7 [shape = 'u32[2048]{0}', space=vmem, size = 0x2000, scoped, tag = 'scoped memory for model_forward.2']
  %s0 = inlined_call_operand.vmem [shape: f32[4,16,55], index: 0, kind: input, shape index: {}]
  %s1 = inlined_call_operand.vmem [shape: f32[4,32,16], index: 1, kind: input, shape index: {}]
  %s2 = inlined_call_operand.vmem [shape: f32[32,1], index: 2, kind: input, shape index: {}]
  %s3 = inlined_call_operand.vmem [shape: f32[1,132], index: 3, kind: input, shape index: {}]
  %s4 = inlined_call_operand.vmem [shape: f32[54,144], index: 4, kind: input, shape index: {}]
  %s5 = inlined_call_operand.<no memory space> [shape: f32[], index: 5, kind: input, shape index: {}]
  %s6 = inlined_call_operand.<no memory space> [shape: f32[], index: 6, kind: input, shape index: {}]
  %s7 = inlined_call_operand.<no memory space> [shape: s32[], index: 7, kind: input, shape index: {}]
  %s8 = inlined_call_operand.vmem [shape: f32[16,132], index: 8, kind: output, shape index: {0}]
  %s9 = inlined_call_operand.vmem [shape: f32[32,144], index: 9, kind: output, shape index: {1}]
  %10 = xla_tuple %s8, %s9
  %s11 = sld [smem:[#allocation0]]
  $region38: #{model_forward.2} parent=0
    _
  %s13 = ssub.s32 1, %s11
  %s14 = scalar_select 0, %s13, %s11
  %v15 = vstv %s5
  %v16 = vstv %s6
  %v17 = vstv %s7
  $region1: #{model_forward.2} parent=0
    #allocation8 [shape = 'u8[57344]{0}', space=vmem, size = 0xe000, dematerialized = true, scoped, tag = 'FusionAdapter Buffer %fusion.1 = f32[55,145]{1,0:T(8,128)} fusion(%param_4.4, %param_5.3, %param_6.4, %param_7.3), kind=kLoop, calls=%fused_computation.1.clone, metadata={op_name="jit(model_forward)/concatenate" stack_frame_id=12}']
    // Predicated region
    $region2: #{model_forward.2} parent=1 // pred_check
      _
    $region3: #{model_forward.2} parent=1 // pred_check_branch
      %19 = sbr.rel (0) target = $region5
    $region4: #{model_forward.2} parent=1 // pred_region
      _
    $region5: #{model_forward.2} parent=1 // pred_fallthru
      _
    // Predicated region
    $region6: #{model_forward.2} parent=1 // pred_check
      _
    $region7: #{model_forward.2} parent=1 // pred_check_branch
      %21 = sbr.rel (0) target = $region9
    $region8: #{model_forward.2} parent=1 // pred_region
      _
    $region9: #{model_forward.2} parent=1 // pred_fallthru
      _
    // Predicated region
    $region10: #{model_forward.2} parent=1 // pred_check
      _
    $region11: #{model_forward.2} parent=1 // pred_check_branch
      %23 = sbr.rel (0) target = $region13
    $region12: #{model_forward.2} parent=1 // pred_region
      _
    $region13: #{model_forward.2} parent=1 // pred_fallthru
      _
    // Predicated region
    $region14: #{model_forward.2} parent=1 // pred_check
      _
    $region15: #{model_forward.2} parent=1 // pred_check_branch
      %25 = sbr.rel (0) target = $region17
    $region16: #{model_forward.2} parent=1 // pred_region
      _
    $region17: #{model_forward.2} parent=1 // pred_fallthru
      _
    // Predicated region
    $region18: #{model_forward.2} parent=1 // pred_check
      _
    $region19: #{model_forward.2} parent=1 // pred_check_branch
      %27 = sbr.rel (0) target = $region21
    $region20: #{model_forward.2} parent=1 // pred_region
      _
    $region21: #{model_forward.2} parent=1 // pred_fallthru
      _
    %v28 = vld [vmem:[%s4] sm:$0xff]
    %v29 = vlaneseq
    %v30 = vshrl.u32 %v29, 7
    %vm32 = vcmp.lt.s32.totalorder %v30, 54
    %v33 = vsel %vm32, %v28, %v15
    %v34 = vlaneseq
    %v35 = vand.u32 %v34, 127
    %vm37 = vcmp.lt.s32.totalorder %v35, 144
    %v38 = vsel %vm37, %v33, %v15
    %v39 = vlaneseq
    %v40 = vshrl.u32 %v39, 7
    %43 = xla_tuple %v40, %v17
    %44 = xla_tuple %43
    %vm45 = vcmp.lt.s32.totalorder %v40, %v17
    %v46 = vsel %vm45, 1, 0
    %47 = xla_tuple %v46
    %48 = xla_tuple %v46, %v38, %v16
    %49 = xla_tuple %48
    %v50 = vsel %vm45, %v38, %v16
    %51 = xla_tuple %v50
    %s53 = ssub.s32 256, 1
    %54 = vst [vmem:[#allocation8] sm:%s53] %v50
    %s55 = scalar_lea.vmem %s4, 8
    %v56 = vld [vmem:[%s55] sm:$0xff]
    %v57 = vlaneseq
    %v58 = vshrl.u32 %v57, 7
    %vm60 = vcmp.lt.s32.totalorder %v58, 54
    %v61 = vsel %vm60, %v56, %v15
    %v62 = vlaneseq
    %v63 = vand.u32 %v62, 127
    %v64 = vadd.s32 %v63, 128
    %vm65 = vcmp.lt.s32.totalorder %v64, 144
    %v66 = vsel %vm65, %v61, %v15
    %v67 = vlaneseq
    %v68 = vshrl.u32 %v67, 7
    %71 = xla_tuple %v68, %v17
    %72 = xla_tuple %71
    %vm73 = vcmp.lt.s32.totalorder %v68, %v17
    %v74 = vsel %vm73, 1, 0
    %75 = xla_tuple %v74
    %76 = xla_tuple %v74, %v66, %v16
    %77 = xla_tuple %76
    %v78 = vsel %vm73, %v66, %v16
    %79 = xla_tuple %v78
    %s80 = scalar_lea.vmem [#allocation8], 8
    %s82 = ssub.s32 256, 1
    %83 = vst [vmem:[%s80] sm:%s82] %v78
    %s84 = scalar_lea.vmem %s4, 16
    %v85 = vld [vmem:[%s84] sm:$0xff]
    %v86 = vlaneseq
    %v87 = vshrl.u32 %v86, 7
    %v88 = vadd.s32 %v87, 8
    %vm89 = vcmp.lt.s32.totalorder %v88, 54
    %v90 = vsel %vm89, %v85, %v15
    %v91 = vlaneseq
    %v92 = vand.u32 %v91, 127
    %vm94 = vcmp.lt.s32.totalorder %v92, 144
    %v95 = vsel %vm94, %v90, %v15
    %v96 = vlaneseq
    %v97 = vshrl.u32 %v96, 7
    %v99 = vadd.s32 %v97, 8
    %100 = xla_tuple %v99, %v17
    %101 = xla_tuple %100
    %vm102 = vcmp.lt.s32.totalorder %v99, %v17
    %v103 = vsel %vm102, 1, 0
    %104 = xla_tuple %v103
    %105 = xla_tuple %v103, %v95, %v16
    %106 = xla_tuple %105
    %v107 = vsel %vm102, %v95, %v16
    %108 = xla_tuple %v107
    %s109 = scalar_lea.vmem [#allocation8], 16
    %s111 = ssub.s32 256, 1
    %112 = vst [vmem:[%s109] sm:%s111] %v107
    %s113 = scalar_lea.vmem %s4, 24
    %v114 = vld [vmem:[%s113] sm:$0xff]
    %v115 = vlaneseq
    %v116 = vshrl.u32 %v115, 7
    %v117 = vadd.s32 %v116, 8
    %vm118 = vcmp.lt.s32.totalorder %v117, 54
    %v119 = vsel %vm118, %v114, %v15
    %v120 = vlaneseq
    %v121 = vand.u32 %v120, 127
    %v122 = vadd.s32 %v121, 128
    %vm123 = vcmp.lt.s32.totalorder %v122, 144
    %v124 = vsel %vm123, %v119, %v15
    %v125 = vlaneseq
    %v126 = vshrl.u32 %v125, 7
    %v128 = vadd.s32 %v126, 8
    %129 = xla_tuple %v128, %v17
    %130 = xla_tuple %129
    %vm131 = vcmp.lt.s32.totalorder %v128, %v17
    %v132 = vsel %vm131, 1, 0
    %133 = xla_tuple %v132
    %134 = xla_tuple %v132, %v124, %v16
    %135 = xla_tuple %134
    %v136 = vsel %vm131, %v124, %v16
    %137 = xla_tuple %v136
    %s138 = scalar_lea.vmem [#allocation8], 24
    %s140 = ssub.s32 256, 1
    %141 = vst [vmem:[%s138] sm:%s140] %v136
    %s142 = scalar_lea.vmem %s4, 32
    %v143 = vld [vmem:[%s142] sm:$0xff]
    %v144 = vlaneseq
    %v145 = vshrl.u32 %v144, 7
    %v146 = vadd.s32 %v145, 16
    %vm147 = vcmp.lt.s32.totalorder %v146, 54
    %v148 = vsel %vm147, %v143, %v15
    %v149 = vlaneseq
    %v150 = vand.u32 %v149, 127
    %vm152 = vcmp.lt.s32.totalorder %v150, 144
    %v153 = vsel %vm152, %v148, %v15
    %v154 = vlaneseq
    %v155 = vshrl.u32 %v154, 7
    %v157 = vadd.s32 %v155, 16
    %158 = xla_tuple %v157, %v17
    %159 = xla_tuple %158
    %vm160 = vcmp.lt.s32.totalorder %v157, %v17
    %v161 = vsel %vm160, 1, 0
    %162 = xla_tuple %v161
    %163 = xla_tuple %v161, %v153, %v16
    %164 = xla_tuple %163
    %v165 = vsel %vm160, %v153, %v16
    %166 = xla_tuple %v165
    %s167 = scalar_lea.vmem [#allocation8], 32
    %s169 = ssub.s32 256, 1
    %170 = vst [vmem:[%s167] sm:%s169] %v165
    %s171 = scalar_lea.vmem %s4, 40
    %v172 = vld [vmem:[%s171] sm:$0xff]
    %v173 = vlaneseq
    %v174 = vshrl.u32 %v173, 7
    %v175 = vadd.s32 %v174, 16
    %vm176 = vcmp.lt.s32.totalorder %v175, 54
    %v177 = vsel %vm176, %v172, %v15
    %v178 = vlaneseq
    %v179 = vand.u32 %v178, 127
    %v180 = vadd.s32 %v179, 128
    %vm181 = vcmp.lt.s32.totalorder %v180, 144
    %v182 = vsel %vm181, %v177, %v15
    %v183 = vlaneseq
    %v184 = vshrl.u32 %v183, 7
    %v186 = vadd.s32 %v184, 16
    %187 = xla_tuple %v186, %v17
    %188 = xla_tuple %187
    %vm189 = vcmp.lt.s32.totalorder %v186, %v17
    %v190 = vsel %vm189, 1, 0
    %191 = xla_tuple %v190
    %192 = xla_tuple %v190, %v182, %v16
    %193 = xla_tuple %192
    %v194 = vsel %vm189, %v182, %v16
    %195 = xla_tuple %v194
    %s196 = scalar_lea.vmem [#allocation8], 40
    %s198 = ssub.s32 256, 1
    %199 = vst [vmem:[%s196] sm:%s198] %v194
    %s200 = scalar_lea.vmem %s4, 48
    %v201 = vld [vmem:[%s200] sm:$0xff]
    %v202 = vlaneseq
    %v203 = vshrl.u32 %v202, 7
    %v204 = vadd.s32 %v203, 24
    %vm205 = vcmp.lt.s32.totalorder %v204, 54
    %v206 = vsel %vm205, %v201, %v15
    %v207 = vlaneseq
    %v208 = vand.u32 %v207, 127
    %vm210 = vcmp.lt.s32.totalorder %v208, 144
    %v211 = vsel %vm210, %v206, %v15
    %v212 = vlaneseq
    %v213 = vshrl.u32 %v212, 7
    %v215 = vadd.s32 %v213, 24
    %216 = xla_tuple %v215, %v17
    %217 = xla_tuple %216
    %vm218 = vcmp.lt.s32.totalorder %v215, %v17
    %v219 = vsel %vm218, 1, 0
    %220 = xla_tuple %v219
    %221 = xla_tuple %v219, %v211, %v16
    %222 = xla_tuple %221
    %v223 = vsel %vm218, %v211, %v16
    %224 = xla_tuple %v223
    %s225 = scalar_lea.vmem [#allocation8], 48
    %s227 = ssub.s32 256, 1
    %228 = vst [vmem:[%s225] sm:%s227] %v223
    %s229 = scalar_lea.vmem %s4, 56
    %v230 = vld [vmem:[%s229] sm:$0xff]
    %v231 = vlaneseq
    %v232 = vshrl.u32 %v231, 7
    %v233 = vadd.s32 %v232, 24
    %vm234 = vcmp.lt.s32.totalorder %v233, 54
    %v235 = vsel %vm234, %v230, %v15
    %v236 = vlaneseq
    %v237 = vand.u32 %v236, 127
    %v238 = vadd.s32 %v237, 128
    %vm239 = vcmp.lt.s32.totalorder %v238, 144
    %v240 = vsel %vm239, %v235, %v15
    %v241 = vlaneseq
    %v242 = vshrl.u32 %v241, 7
    %v244 = vadd.s32 %v242, 24
    %245 = xla_tuple %v244, %v17
    %246 = xla_tuple %245
    %vm247 = vcmp.lt.s32.totalorder %v244, %v17
    %v248 = vsel %vm247, 1, 0
    %249 = xla_tuple %v248
    %250 = xla_tuple %v248, %v240, %v16
    %251 = xla_tuple %250
    %v252 = vsel %vm247, %v240, %v16
    %253 = xla_tuple %v252
    %s254 = scalar_lea.vmem [#allocation8], 56
    %s256 = ssub.s32 256, 1
    %257 = vst [vmem:[%s254] sm:%s256] %v252
    %s258 = scalar_lea.vmem %s4, 64
    %v259 = vld [vmem:[%s258] sm:$0xff]
    %v260 = vlaneseq
    %v261 = vshrl.u32 %v260, 7
    %v262 = vadd.s32 %v261, 32
    %vm263 = vcmp.lt.s32.totalorder %v262, 54
    %v264 = vsel %vm263, %v259, %v15
    %v265 = vlaneseq
    %v266 = vand.u32 %v265, 127
    %vm268 = vcmp.lt.s32.totalorder %v266, 144
    %v269 = vsel %vm268, %v264, %v15
    %v270 = vlaneseq
    %v271 = vshrl.u32 %v270, 7
    %v273 = vadd.s32 %v271, 32
    %274 = xla_tuple %v273, %v17
    %275 = xla_tuple %274
    %vm276 = vcmp.lt.s32.totalorder %v273, %v17
    %v277 = vsel %vm276, 1, 0
    %278 = xla_tuple %v277
    %279 = xla_tuple %v277, %v269, %v16
    %280 = xla_tuple %279
    %v281 = vsel %vm276, %v269, %v16
    %282 = xla_tuple %v281
    %s283 = scalar_lea.vmem [#allocation8], 64
    %s285 = ssub.s32 256, 1
    %286 = vst [vmem:[%s283] sm:%s285] %v281
    %s287 = scalar_lea.vmem %s4, 72
    %v288 = vld [vmem:[%s287] sm:$0xff]
    %v289 = vlaneseq
    %v290 = vshrl.u32 %v289, 7
    %v291 = vadd.s32 %v290, 32
    %vm292 = vcmp.lt.s32.totalorder %v291, 54
    %v293 = vsel %vm292, %v288, %v15
    %v294 = vlaneseq
    %v295 = vand.u32 %v294, 127
    %v296 = vadd.s32 %v295, 128
    %vm297 = vcmp.lt.s32.totalorder %v296, 144
    %v298 = vsel %vm297, %v293, %v15
    %v299 = vlaneseq
    %v300 = vshrl.u32 %v299, 7
    %v302 = vadd.s32 %v300, 32
    %303 = xla_tuple %v302, %v17
    %304 = xla_tuple %303
    %vm305 = vcmp.lt.s32.totalorder %v302, %v17
    %v306 = vsel %vm305, 1, 0
    %307 = xla_tuple %v306
    %308 = xla_tuple %v306, %v298, %v16
    %309 = xla_tuple %308
    %v310 = vsel %vm305, %v298, %v16
    %311 = xla_tuple %v310
    %s312 = scalar_lea.vmem [#allocation8], 72
    %s314 = ssub.s32 256, 1
    %315 = vst [vmem:[%s312] sm:%s314] %v310
    %s316 = scalar_lea.vmem %s4, 80
    %v317 = vld [vmem:[%s316] sm:$0xff]
    %v318 = vlaneseq
    %v319 = vshrl.u32 %v318, 7
    %v320 = vadd.s32 %v319, 40
    %vm321 = vcmp.lt.s32.totalorder %v320, 54
    %v322 = vsel %vm321, %v317, %v15
    %v323 = vlaneseq
    %v324 = vand.u32 %v323, 127
    %vm326 = vcmp.lt.s32.totalorder %v324, 144
    %v327 = vsel %vm326, %v322, %v15
    %v328 = vlaneseq
    %v329 = vshrl.u32 %v328, 7
    %v331 = vadd.s32 %v329, 40
    %332 = xla_tuple %v331, %v17
    %333 = xla_tuple %332
    %vm334 = vcmp.lt.s32.totalorder %v331, %v17
    %v335 = vsel %vm334, 1, 0
    %336 = xla_tuple %v335
    %337 = xla_tuple %v335, %v327, %v16
    %338 = xla_tuple %337
    %v339 = vsel %vm334, %v327, %v16
    %340 = xla_tuple %v339
    %s341 = scalar_lea.vmem [#allocation8], 80
    %s343 = ssub.s32 256, 1
    %344 = vst [vmem:[%s341] sm:%s343] %v339
    %s345 = scalar_lea.vmem %s4, 88
    %v346 = vld [vmem:[%s345] sm:$0xff]
    %v347 = vlaneseq
    %v348 = vshrl.u32 %v347, 7
    %v349 = vadd.s32 %v348, 40
    %vm350 = vcmp.lt.s32.totalorder %v349, 54
    %v351 = vsel %vm350, %v346, %v15
    %v352 = vlaneseq
    %v353 = vand.u32 %v352, 127
    %v354 = vadd.s32 %v353, 128
    %vm355 = vcmp.lt.s32.totalorder %v354, 144
    %v356 = vsel %vm355, %v351, %v15
    %v357 = vlaneseq
    %v358 = vshrl.u32 %v357, 7
    %v360 = vadd.s32 %v358, 40
    %361 = xla_tuple %v360, %v17
    %362 = xla_tuple %361
    %vm363 = vcmp.lt.s32.totalorder %v360, %v17
    %v364 = vsel %vm363, 1, 0
    %365 = xla_tuple %v364
    %366 = xla_tuple %v364, %v356, %v16
    %367 = xla_tuple %366
    %v368 = vsel %vm363, %v356, %v16
    %369 = xla_tuple %v368
    %s370 = scalar_lea.vmem [#allocation8], 88
    %s372 = ssub.s32 256, 1
    %373 = vst [vmem:[%s370] sm:%s372] %v368
    %s374 = scalar_lea.vmem %s4, 96
    %v375 = vld [vmem:[%s374] sm:$0xff]
    %v376 = vlaneseq
    %v377 = vshrl.u32 %v376, 7
    %v378 = vadd.s32 %v377, 48
    %vm379 = vcmp.lt.s32.totalorder %v378, 54
    %v380 = vsel %vm379, %v375, %v15
    %v381 = vlaneseq
    %v382 = vand.u32 %v381, 127
    %vm384 = vcmp.lt.s32.totalorder %v382, 144
    %v385 = vsel %vm384, %v380, %v15
    %v386 = vlaneseq
    %v387 = vshrl.u32 %v386, 7
    %v389 = vadd.s32 %v387, 48
    %390 = xla_tuple %v389, %v17
    %391 = xla_tuple %390
    %vm392 = vcmp.lt.s32.totalorder %v389, %v17
    %v393 = vsel %vm392, 1, 0
    %394 = xla_tuple %v393
    %395 = xla_tuple %v393, %v385, %v16
    %396 = xla_tuple %395
    %v397 = vsel %vm392, %v385, %v16
    %398 = xla_tuple %v397
    %s399 = scalar_lea.vmem [#allocation8], 96
    %s401 = ssub.s32 256, 1
    %402 = vst [vmem:[%s399] sm:%s401] %v397
    %s403 = scalar_lea.vmem %s4, 104
    %v404 = vld [vmem:[%s403] sm:$0xff]
    %v405 = vlaneseq
    %v406 = vshrl.u32 %v405, 7
    %v407 = vadd.s32 %v406, 48
    %vm408 = vcmp.lt.s32.totalorder %v407, 54
    %v409 = vsel %vm408, %v404, %v15
    %v410 = vlaneseq
    %v411 = vand.u32 %v410, 127
    %v412 = vadd.s32 %v411, 128
    %vm413 = vcmp.lt.s32.totalorder %v412, 144
    %v414 = vsel %vm413, %v409, %v15
    %v415 = vlaneseq
    %v416 = vshrl.u32 %v415, 7
    %v418 = vadd.s32 %v416, 48
    %419 = xla_tuple %v418, %v17
    %420 = xla_tuple %419
    %vm421 = vcmp.lt.s32.totalorder %v418, %v17
    %v422 = vsel %vm421, 1, 0
    %423 = xla_tuple %v422
    %424 = xla_tuple %v422, %v414, %v16
    %425 = xla_tuple %424
    %v426 = vsel %vm421, %v414, %v16
    %427 = xla_tuple %v426
    %s428 = scalar_lea.vmem [#allocation8], 104
    %s430 = ssub.s32 256, 1
    %431 = vst [vmem:[%s428] sm:%s430] %v426
    %v432 = vld [vmem:[%s0] sm:$0xff]
    %v433 = vld [vmem:[%s0 + $0x8] sm:$0xff]
    %v434 = vld [vmem:[#allocation8] sm:$0xff]
    %v435 = vld [vmem:[#allocation8 + $0x8] sm:$0xff]
    %v436 = vld [vmem:[#allocation8 + $0x10] sm:$0xff]
    %v437 = vld [vmem:[#allocation8 + $0x18] sm:$0xff]
    %v438 = vld [vmem:[#allocation8 + $0x20] sm:$0xff]
    %v439 = vld [vmem:[#allocation8 + $0x28] sm:$0xff]
    %v440 = vld [vmem:[#allocation8 + $0x30] sm:$0xff]
    %v441 = vld [vmem:[#allocation8 + $0x38] sm:$0xff]
    %v442 = vld [vmem:[#allocation8 + $0x40] sm:$0xff]
    %v443 = vld [vmem:[#allocation8 + $0x48] sm:$0xff]
    %v444 = vld [vmem:[#allocation8 + $0x50] sm:$0xff]
    %v445 = vld [vmem:[#allocation8 + $0x58] sm:$0xff]
    %v446 = vld [vmem:[#allocation8 + $0x60] sm:$0x7f]
    %v447 = vld [vmem:[#allocation8 + $0x68] sm:$0x7f]
    %s448 = scalar_lea.vmem %s0, 16
    %v449 = vld [vmem:[%s448] sm:$0xff]
    %v450 = vld [vmem:[%s448 + $0x8] sm:$0xff]
    %465 = vrot.lane.b32.xlu0 %v434, 127
    %v466 = vpop.permute.xlu0 %465
    %467 = vrot.lane.b32.xlu0 %v435, 127
    %v468 = vpop.permute.xlu0 %467
    %469 = vrot.lane.b32.xlu0 %v436, 127
    %v470 = vpop.permute.xlu0 %469
    %471 = vrot.lane.b32.xlu0 %v437, 127
    %v472 = vpop.permute.xlu0 %471
    %473 = vrot.lane.b32.xlu0 %v438, 127
    %v474 = vpop.permute.xlu0 %473
    %475 = vrot.lane.b32.xlu0 %v439, 127
    %v476 = vpop.permute.xlu0 %475
    %477 = vrot.lane.b32.xlu0 %v440, 127
    %v478 = vpop.permute.xlu0 %477
    %479 = vrot.lane.b32.xlu0 %v441, 127
    %v480 = vpop.permute.xlu0 %479
    %481 = vrot.lane.b32.xlu0 %v442, 127
    %v482 = vpop.permute.xlu0 %481
    %483 = vrot.lane.b32.xlu0 %v443, 127
    %v484 = vpop.permute.xlu0 %483
    %485 = vrot.lane.b32.xlu0 %v444, 127
    %v486 = vpop.permute.xlu0 %485
    %487 = vrot.lane.b32.xlu0 %v445, 127
    %v488 = vpop.permute.xlu0 %487
    %489 = vrot.lane.b32.xlu0 %v446, 127
    %v490 = vpop.permute.xlu0 %489
    %491 = vrot.lane.b32.xlu0 %v447, 127
    %v492 = vpop.permute.xlu0 %491
    %vm493 = vcmask 1039360
    %v494 = vsel %vm493, %v466, %v468
    %v495 = vsel %vm493, %v470, %v472
    %v496 = vsel %vm493, %v474, %v476
    %v497 = vsel %vm493, %v478, %v480
    %v498 = vsel %vm493, %v482, %v484
    %v499 = vsel %vm493, %v486, %v488
    %v500 = vsel %vm493, %v490, %v492
    %vm513 = vcmask 449536
    %v515 = vsel %vm513, %v449, 0
    %v518 = vsel %vm513, %v450, 0
    %vm520 = vcmask 1046528
    %v521 = vsel %vm520, %v500, 0
    %v523 = vsel %vm520, %v492, 0
    %525 = vmatpush.msra.mxu0 0.0
    %526 = vmatpush.msra.mxu0 0.0
    %527 = vmatpush.msra.mxu0 0.0
    %528 = vmatpush.msra.mxu0 0.0
    %529 = vmatpush.msra.mxu0 0.0
    %530 = vmatpush.msra.mxu0 0.0
    %531 = vmatpush.msra.mxu0 0.0
    %532 = vmatpush.msra.mxu0 0.0
    %533 = vmatpush.msra.mxu0 0.0
    %534 = vmatpush.msra.mxu0 %v521
    %535 = vmatpush.msra.mxu0 %v499
    %536 = vmatpush.msra.mxu0 %v498
    %537 = vmatpush.msra.mxu0 %v497
    %538 = vmatpush.msra.mxu0 %v496
    %539 = vmatpush.msra.mxu0 %v495
    %540 = vmatpush.msra.mxu0 %v494
    %541 = vmatmul.f32.gmra.mxu0 %v515
    %v542 = vpop.f32.mrf.mxu0
    %v543 = vadd.f32 0.0, %v542
    %544 = vmatmul.f32.gmra.mxu0 %v518
    %v545 = vpop.f32.mrf.mxu0
    %v546 = vadd.f32 0.0, %v545
    %547 = vdwg.mxu0
    %548 = vmatpush.msra.mxu0 0.0
    %549 = vmatpush.msra.mxu0 0.0
    %550 = vmatpush.msra.mxu0 0.0
    %551 = vmatpush.msra.mxu0 0.0
    %552 = vmatpush.msra.mxu0 0.0
    %553 = vmatpush.msra.mxu0 0.0
    %554 = vmatpush.msra.mxu0 0.0
    %555 = vmatpush.msra.mxu0 0.0
    %556 = vmatpush.msra.mxu0 0.0
    %557 = vmatpush.msra.mxu0 %v523
    %558 = vmatpush.msra.mxu0 %v488
    %559 = vmatpush.msra.mxu0 %v484
    %560 = vmatpush.msra.mxu0 %v480
    %561 = vmatpush.msra.mxu0 %v476
    %562 = vmatpush.msra.mxu0 %v472
    %563 = vmatpush.msra.mxu0 %v468
    %564 = vmatmul.f32.gmra.mxu0 %v515
    %v565 = vpop.f32.mrf.mxu0
    %v566 = vadd.f32 0.0, %v565
    %567 = vmatmul.f32.gmra.mxu0 %v518
    %v568 = vpop.f32.mrf.mxu0
    %v569 = vadd.f32 0.0, %v568
    %570 = vdwg.mxu0
    %v572 = vsel %vm513, %v432, 0
    %v575 = vsel %vm513, %v433, 0
    %v577 = vsel %vm520, %v446, 0
    %v579 = vsel %vm520, %v447, 0
    %581 = vmatpush.msra.mxu0 0.0
    %582 = vmatpush.msra.mxu0 0.0
    %583 = vmatpush.msra.mxu0 0.0
    %584 = vmatpush.msra.mxu0 0.0
    %585 = vmatpush.msra.mxu0 0.0
    %586 = vmatpush.msra.mxu0 0.0
    %587 = vmatpush.msra.mxu0 0.0
    %588 = vmatpush.msra.mxu0 0.0
    %589 = vmatpush.msra.mxu0 0.0
    %590 = vmatpush.msra.mxu0 %v577
    %591 = vmatpush.msra.mxu0 %v444
    %592 = vmatpush.msra.mxu0 %v442
    %593 = vmatpush.msra.mxu0 %v440
    %594 = vmatpush.msra.mxu0 %v438
    %595 = vmatpush.msra.mxu0 %v436
    %596 = vmatpush.msra.mxu0 %v434
    %597 = vmatmul.f32.gmra.mxu0 %v572
    %v598 = vpop.f32.mrf.mxu0
    %v599 = vadd.f32 %v543, %v598
    %600 = vmatmul.f32.gmra.mxu0 %v575
    %v601 = vpop.f32.mrf.mxu0
    %v602 = vadd.f32 %v546, %v601
    %603 = vdwg.mxu0
    %604 = vmatpush.msra.mxu0 0.0
    %605 = vmatpush.msra.mxu0 0.0
    %606 = vmatpush.msra.mxu0 0.0
    %607 = vmatpush.msra.mxu0 0.0
    %608 = vmatpush.msra.mxu0 0.0
    %609 = vmatpush.msra.mxu0 0.0
    %610 = vmatpush.msra.mxu0 0.0
    %611 = vmatpush.msra.mxu0 0.0
    %612 = vmatpush.msra.mxu0 0.0
    %613 = vmatpush.msra.mxu0 %v579
    %614 = vmatpush.msra.mxu0 %v445
    %615 = vmatpush.msra.mxu0 %v443
    %616 = vmatpush.msra.mxu0 %v441
    %617 = vmatpush.msra.mxu0 %v439
    %618 = vmatpush.msra.mxu0 %v437
    %619 = vmatpush.msra.mxu0 %v435
    %620 = vmatmul.f32.gmra.mxu0 %v572
    %v621 = vpop.f32.mrf.mxu0
    %v622 = vadd.f32 %v566, %v621
    %623 = vmatmul.f32.gmra.mxu0 %v575
    %v624 = vpop.f32.mrf.mxu0
    %v625 = vadd.f32 %v569, %v624
    %626 = vdwg.mxu0
    %s627 = scalar_lea.vmem %s0, 32
    %v628 = vld [vmem:[%s627] sm:$0xff]
    %v629 = vld [vmem:[%s627 + $0x8] sm:$0xff]
    %630 = vrot.lane.b32.xlu0 %v434, 116
    %v631 = vpop.permute.xlu0 %630
    %632 = vrot.lane.b32.xlu0 %v435, 116
    %v633 = vpop.permute.xlu0 %632
    %634 = vrot.lane.b32.xlu0 %v436, 116
    %v635 = vpop.permute.xlu0 %634
    %636 = vrot.lane.b32.xlu0 %v437, 116
    %v637 = vpop.permute.xlu0 %636
    %638 = vrot.lane.b32.xlu0 %v438, 116
    %v639 = vpop.permute.xlu0 %638
    %640 = vrot.lane.b32.xlu0 %v439, 116
    %v641 = vpop.permute.xlu0 %640
    %642 = vrot.lane.b32.xlu0 %v440, 116
    %v643 = vpop.permute.xlu0 %642
    %644 = vrot.lane.b32.xlu0 %v441, 116
    %v645 = vpop.permute.xlu0 %644
    %646 = vrot.lane.b32.xlu0 %v442, 116
    %v647 = vpop.permute.xlu0 %646
    %648 = vrot.lane.b32.xlu0 %v443, 116
    %v649 = vpop.permute.xlu0 %648
    %650 = vrot.lane.b32.xlu0 %v444, 116
    %v651 = vpop.permute.xlu0 %650
    %652 = vrot.lane.b32.xlu0 %v445, 116
    %v653 = vpop.permute.xlu0 %652
    %654 = vrot.lane.b32.xlu0 %v446, 116
    %v655 = vpop.permute.xlu0 %654
    %656 = vrot.lane.b32.xlu0 %v447, 116
    %v657 = vpop.permute.xlu0 %656
    %vm658 = vcmask 949248
    %v659 = vsel %vm658, %v631, %v633
    %v660 = vsel %vm658, %v635, %v637
    %v661 = vsel %vm658, %v639, %v641
    %v662 = vsel %vm658, %v643, %v645
    %v663 = vsel %vm658, %v647, %v649
    %v664 = vsel %vm658, %v651, %v653
    %v665 = vsel %vm658, %v655, %v657
    %v679 = vsel %vm513, %v628, 0
    %v682 = vsel %vm513, %v629, 0
    %v684 = vsel %vm520, %v665, 0
    %v686 = vsel %vm520, %v657, 0
    %688 = vmatpush.msra.mxu0 0.0
    %689 = vmatpush.msra.mxu0 0.0
    %690 = vmatpush.msra.mxu0 0.0
    %691 = vmatpush.msra.mxu0 0.0
    %692 = vmatpush.msra.mxu0 0.0
    %693 = vmatpush.msra.mxu0 0.0
    %694 = vmatpush.msra.mxu0 0.0
    %695 = vmatpush.msra.mxu0 0.0
    %696 = vmatpush.msra.mxu0 0.0
    %697 = vmatpush.msra.mxu0 %v684
    %698 = vmatpush.msra.mxu0 %v664
    %699 = vmatpush.msra.mxu0 %v663
    %700 = vmatpush.msra.mxu0 %v662
    %701 = vmatpush.msra.mxu0 %v661
    %702 = vmatpush.msra.mxu0 %v660
    %703 = vmatpush.msra.mxu0 %v659
    %704 = vmatmul.f32.gmra.mxu0 %v679
    %v705 = vpop.f32.mrf.mxu0
    %v706 = vadd.f32 0.0, %v705
    %707 = vmatmul.f32.gmra.mxu0 %v682
    %v708 = vpop.f32.mrf.mxu0
    %v709 = vadd.f32 0.0, %v708
    %710 = vdwg.mxu0
    %711 = vmatpush.msra.mxu0 0.0
    %712 = vmatpush.msra.mxu0 0.0
    %713 = vmatpush.msra.mxu0 0.0
    %714 = vmatpush.msra.mxu0 0.0
    %715 = vmatpush.msra.mxu0 0.0
    %716 = vmatpush.msra.mxu0 0.0
    %717 = vmatpush.msra.mxu0 0.0
    %718 = vmatpush.msra.mxu0 0.0
    %719 = vmatpush.msra.mxu0 0.0
    %720 = vmatpush.msra.mxu0 %v686
    %721 = vmatpush.msra.mxu0 %v653
    %722 = vmatpush.msra.mxu0 %v649
    %723 = vmatpush.msra.mxu0 %v645
    %724 = vmatpush.msra.mxu0 %v641
    %725 = vmatpush.msra.mxu0 %v637
    %726 = vmatpush.msra.mxu0 %v633
    %727 = vmatmul.f32.gmra.mxu0 %v679
    %v728 = vpop.f32.mrf.mxu0
    %v729 = vadd.f32 0.0, %v728
    %730 = vmatmul.f32.gmra.mxu0 %v682
    %v731 = vpop.f32.mrf.mxu0
    %v732 = vadd.f32 0.0, %v731
    %733 = vdwg.mxu0
    %v734 = vadd.f32 %v599, %v706
    %v735 = vadd.f32 %v622, %v729
    %v736 = vadd.f32 %v602, %v709
    %v737 = vadd.f32 %v625, %v732
    %s738 = scalar_lea.vmem %s0, 48
    %v739 = vld [vmem:[%s738] sm:$0xff]
    %v740 = vld [vmem:[%s738 + $0x8] sm:$0xff]
    %741 = vrot.lane.b32.xlu0 %v434, 115
    %v742 = vpop.permute.xlu0 %741
    %743 = vrot.lane.b32.xlu0 %v435, 115
    %v744 = vpop.permute.xlu0 %743
    %745 = vrot.lane.b32.xlu0 %v436, 115
    %v746 = vpop.permute.xlu0 %745
    %747 = vrot.lane.b32.xlu0 %v437, 115
    %v748 = vpop.permute.xlu0 %747
    %749 = vrot.lane.b32.xlu0 %v438, 115
    %v750 = vpop.permute.xlu0 %749
    %751 = vrot.lane.b32.xlu0 %v439, 115
    %v752 = vpop.permute.xlu0 %751
    %753 = vrot.lane.b32.xlu0 %v440, 115
    %v754 = vpop.permute.xlu0 %753
    %755 = vrot.lane.b32.xlu0 %v441, 115
    %v756 = vpop.permute.xlu0 %755
    %757 = vrot.lane.b32.xlu0 %v442, 115
    %v758 = vpop.permute.xlu0 %757
    %759 = vrot.lane.b32.xlu0 %v443, 115
    %v760 = vpop.permute.xlu0 %759
    %761 = vrot.lane.b32.xlu0 %v444, 115
    %v762 = vpop.permute.xlu0 %761
    %763 = vrot.lane.b32.xlu0 %v445, 115
    %v764 = vpop.permute.xlu0 %763
    %765 = vrot.lane.b32.xlu0 %v446, 115
    %v766 = vpop.permute.xlu0 %765
    %767 = vrot.lane.b32.xlu0 %v447, 115
    %v768 = vpop.permute.xlu0 %767
    %vm769 = vcmask 941056
    %v770 = vsel %vm769, %v742, %v744
    %v771 = vsel %vm769, %v746, %v748
    %v772 = vsel %vm769, %v750, %v752
    %v773 = vsel %vm769, %v754, %v756
    %v774 = vsel %vm769, %v758, %v760
    %v775 = vsel %vm769, %v762, %v764
    %v776 = vsel %vm769, %v766, %v768
    %v790 = vsel %vm513, %v739, 0
    %v793 = vsel %vm513, %v740, 0
    %v795 = vsel %vm520, %v776, 0
    %v797 = vsel %vm520, %v768, 0
    %799 = vmatpush.msra.mxu0 0.0
    %800 = vmatpush.msra.mxu0 0.0
    %801 = vmatpush.msra.mxu0 0.0
    %802 = vmatpush.msra.mxu0 0.0
    %803 = vmatpush.msra.mxu0 0.0
    %804 = vmatpush.msra.mxu0 0.0
    %805 = vmatpush.msra.mxu0 0.0
    %806 = vmatpush.msra.mxu0 0.0
    %807 = vmatpush.msra.mxu0 0.0
    %808 = vmatpush.msra.mxu0 %v795
    %809 = vmatpush.msra.mxu0 %v775
    %810 = vmatpush.msra.mxu0 %v774
    %811 = vmatpush.msra.mxu0 %v773
    %812 = vmatpush.msra.mxu0 %v772
    %813 = vmatpush.msra.mxu0 %v771
    %814 = vmatpush.msra.mxu0 %v770
    %815 = vmatmul.f32.gmra.mxu0 %v790
    %v816 = vpop.f32.mrf.mxu0
    %v817 = vadd.f32 0.0, %v816
    %818 = vmatmul.f32.gmra.mxu0 %v793
    %v819 = vpop.f32.mrf.mxu0
    %v820 = vadd.f32 0.0, %v819
    %821 = vdwg.mxu0
    %822 = vmatpush.msra.mxu0 0.0
    %823 = vmatpush.msra.mxu0 0.0
    %824 = vmatpush.msra.mxu0 0.0
    %825 = vmatpush.msra.mxu0 0.0
    %826 = vmatpush.msra.mxu0 0.0
    %827 = vmatpush.msra.mxu0 0.0
    %828 = vmatpush.msra.mxu0 0.0
    %829 = vmatpush.msra.mxu0 0.0
    %830 = vmatpush.msra.mxu0 0.0
    %831 = vmatpush.msra.mxu0 %v797
    %832 = vmatpush.msra.mxu0 %v764
    %833 = vmatpush.msra.mxu0 %v760
    %834 = vmatpush.msra.mxu0 %v756
    %835 = vmatpush.msra.mxu0 %v752
    %836 = vmatpush.msra.mxu0 %v748
    %837 = vmatpush.msra.mxu0 %v744
    %838 = vmatmul.f32.gmra.mxu0 %v790
    %v839 = vpop.f32.mrf.mxu0
    %v840 = vadd.f32 0.0, %v839
    %841 = vmatmul.f32.gmra.mxu0 %v793
    %v842 = vpop.f32.mrf.mxu0
    %v843 = vadd.f32 0.0, %v842
    %844 = vdwg.mxu0
    %v845 = vadd.f32 %v734, %v817
    %v846 = vadd.f32 %v735, %v840
    %v847 = vadd.f32 %v736, %v820
    %v848 = vadd.f32 %v737, %v843
    %v849 = vmul.f32 %v845, 0.5
    %v850 = vmul.f32 %v846, 0.5
    %v851 = vmul.f32 %v847, 0.5
    %v852 = vmul.f32 %v848, 0.5
    %v853 = vmul.f32 %v845, %v845
    %v854 = vmul.f32 %v846, %v846
    %v855 = vmul.f32 %v847, %v847
    %v856 = vmul.f32 %v848, %v848
    %v857 = vmul.f32 %v853, %v845
    %v858 = vmul.f32 %v854, %v846
    %v859 = vmul.f32 %v855, %v847
    %v860 = vmul.f32 %v856, %v848
    %v861 = vmul.f32 %v857, 0.044715
    %v862 = vmul.f32 %v858, 0.044715
    %v863 = vmul.f32 %v859, 0.044715
    %v864 = vmul.f32 %v860, 0.044715
    %v865 = vadd.f32 %v845, %v861
    %v866 = vadd.f32 %v846, %v862
    %v867 = vadd.f32 %v847, %v863
    %v868 = vadd.f32 %v848, %v864
    %v869 = vmul.f32 %v865, 0.7978846
    %v870 = vmul.f32 %v866, 0.7978846
    %v871 = vmul.f32 %v867, 0.7978846
    %v872 = vmul.f32 %v868, 0.7978846
    %v873 = vtanh.pop %v869
    %v874 = vtanh.pop %v870
    %v875 = vtanh.pop %v871
    %v876 = vtanh.pop %v872
    %v877 = vadd.f32 %v873, 1.0
    %v878 = vadd.f32 %v874, 1.0
    %v879 = vadd.f32 %v875, 1.0
    %v880 = vadd.f32 %v876, 1.0
    %v881 = vmul.f32 %v849, %v877
    %v882 = vmul.f32 %v850, %v878
    %v883 = vmul.f32 %v851, %v879
    %v884 = vmul.f32 %v852, %v880
    %885 = vst [vmem:[%s8] sm:$0xff] %v881
    %vm886 = vcmask 31744
    %887 = vst.msk [vmem:[%s8 + $0x8] sm:$0xff] %vm886, %v882
    %888 = vst [vmem:[%s8 + $0x10] sm:$0xff] %v883
    %889 = vst.msk [vmem:[%s8 + $0x18] sm:$0xff] %vm886, %v884
    %890 = vst [vmem:[#allocation2] sm:$0xff] 0.0
    %vm891 = vcmask 261120
    %892 = vst.msk [vmem:[#allocation2 + $0x8] sm:$0xff] %vm891, 0.0
    %893 = vst [vmem:[#allocation2 + $0x10] sm:$0xff] 0.0
    %894 = vst.msk [vmem:[#allocation2 + $0x18] sm:$0xff] %vm891, 0.0
    %v895 = vld [vmem:[%s3] sm:$0x3]
    %v897 = vperm.slane %v895, 0
    %v898 = vperm.slane %v895, 1
    %v901 = vmul.f32 %v881, %v897
    %v902 = vmul.f32 %v882, %v898
    %v903 = vmul.f32 %v883, %v897
    %v904 = vmul.f32 %v884, %v898
    %909 = vrot.lane.b32.xlu0 %v901, 13
    %v910 = vpop.permute.xlu0 %909
    %911 = vrot.lane.b32.xlu0 %v902, 13
    %v912 = vpop.permute.xlu0 %911
    %913 = vrot.lane.b32.xlu0 %v903, 13
    %v914 = vpop.permute.xlu0 %913
    %915 = vrot.lane.b32.xlu0 %v904, 13
    %v916 = vpop.permute.xlu0 %915
    %vm917 = vcmask 105472
    %v918 = vsel %vm917, %v910, %v912
    %v919 = vsel %vm917, %v914, %v916
    %vm924 = vcmask 1047656
    %925 = vst.msk [vmem:[#allocation2] sm:$0xff] %vm924, %v910
    %vm926 = vcmask 138240
    %927 = vst.msk [vmem:[#allocation2 + $0x8] sm:$0xff] %vm926, %v918
    %928 = vst.msk [vmem:[#allocation2 + $0x10] sm:$0xff] %vm924, %v914
    %929 = vst.msk [vmem:[#allocation2 + $0x18] sm:$0xff] %vm926, %v919
    %v930 = vld [vmem:[%s1] sm:$0xff]
    %v931 = vld [vmem:[%s1 + $0x8] sm:$0xff]
    %v932 = vld [vmem:[%s1 + $0x10] sm:$0xff]
    %v933 = vld [vmem:[%s1 + $0x18] sm:$0xff]
    %v934 = vld [vmem:[#allocation2] sm:$0xff]
    %v935 = vld [vmem:[#allocation2 + $0x8] sm:$0xff]
    %v936 = vld [vmem:[#allocation2 + $0x10] sm:$0xff]
    %v937 = vld [vmem:[#allocation2 + $0x18] sm:$0xff]
    %s938 = scalar_lea.vmem %s1, 32
    %v939 = vld [vmem:[%s938] sm:$0xff]
    %v940 = vld [vmem:[%s938 + $0x8] sm:$0xff]
    %v941 = vld [vmem:[%s938 + $0x10] sm:$0xff]
    %v942 = vld [vmem:[%s938 + $0x18] sm:$0xff]
    %947 = vrot.lane.b32.xlu0 %v934, 127
    %v948 = vpop.permute.xlu0 %947
    %949 = vrot.lane.b32.xlu0 %v935, 127
    %v950 = vpop.permute.xlu0 %949
    %951 = vrot.lane.b32.xlu0 %v936, 127
    %v952 = vpop.permute.xlu0 %951
    %953 = vrot.lane.b32.xlu0 %v937, 127
    %v954 = vpop.permute.xlu0 %953
    %v955 = vsel %vm493, %v948, %v950
    %v956 = vsel %vm493, %v952, %v954
    %vm961 = vcmask 130048
    %v963 = vsel %vm961, %v939, 0
    %v966 = vsel %vm961, %v940, 0
    %v969 = vsel %vm961, %v941, 0
    %v972 = vsel %vm961, %v942, 0
    %974 = vmatpush.msra.mxu0 0.0
    %975 = vmatpush.msra.mxu0 0.0
    %976 = vmatpush.msra.mxu0 0.0
    %977 = vmatpush.msra.mxu0 0.0
    %978 = vmatpush.msra.mxu0 0.0
    %979 = vmatpush.msra.mxu0 0.0
    %980 = vmatpush.msra.mxu0 0.0
    %981 = vmatpush.msra.mxu0 0.0
    %982 = vmatpush.msra.mxu0 0.0
    %983 = vmatpush.msra.mxu0 0.0
    %984 = vmatpush.msra.mxu0 0.0
    %985 = vmatpush.msra.mxu0 0.0
    %986 = vmatpush.msra.mxu0 0.0
    %987 = vmatpush.msra.mxu0 0.0
    %988 = vmatpush.msra.mxu0 %v956
    %989 = vmatpush.msra.mxu0 %v955
    %990 = vmatmul.f32.gmra.mxu0 %v963
    %v991 = vpop.f32.mrf.mxu0
    %v992 = vadd.f32 0.0, %v991
    %993 = vmatmul.f32.gmra.mxu0 %v966
    %v994 = vpop.f32.mrf.mxu0
    %v995 = vadd.f32 0.0, %v994
    %996 = vmatmul.f32.gmra.mxu0 %v969
    %v997 = vpop.f32.mrf.mxu0
    %v998 = vadd.f32 0.0, %v997
    %999 = vmatmul.f32.gmra.mxu0 %v972
    %v1000 = vpop.f32.mrf.mxu0
    %v1001 = vadd.f32 0.0, %v1000
    %1002 = vdwg.mxu0
    %1003 = vmatpush.msra.mxu0 0.0
    %1004 = vmatpush.msra.mxu0 0.0
    %1005 = vmatpush.msra.mxu0 0.0
    %1006 = vmatpush.msra.mxu0 0.0
    %1007 = vmatpush.msra.mxu0 0.0
    %1008 = vmatpush.msra.mxu0 0.0
    %1009 = vmatpush.msra.mxu0 0.0
    %1010 = vmatpush.msra.mxu0 0.0
    %1011 = vmatpush.msra.mxu0 0.0
    %1012 = vmatpush.msra.mxu0 0.0
    %1013 = vmatpush.msra.mxu0 0.0
    %1014 = vmatpush.msra.mxu0 0.0
    %1015 = vmatpush.msra.mxu0 0.0
    %1016 = vmatpush.msra.mxu0 0.0
    %1017 = vmatpush.msra.mxu0 %v954
    %1018 = vmatpush.msra.mxu0 %v950
    %1019 = vmatmul.f32.gmra.mxu0 %v963
    %v1020 = vpop.f32.mrf.mxu0
    %v1021 = vadd.f32 0.0, %v1020
    %1022 = vmatmul.f32.gmra.mxu0 %v966
    %v1023 = vpop.f32.mrf.mxu0
    %v1024 = vadd.f32 0.0, %v1023
    %1025 = vmatmul.f32.gmra.mxu0 %v969
    %v1026 = vpop.f32.mrf.mxu0
    %v1027 = vadd.f32 0.0, %v1026
    %1028 = vmatmul.f32.gmra.mxu0 %v972
    %v1029 = vpop.f32.mrf.mxu0
    %v1030 = vadd.f32 0.0, %v1029
    %1031 = vdwg.mxu0
    %v1033 = vsel %vm961, %v930, 0
    %v1036 = vsel %vm961, %v931, 0
    %v1039 = vsel %vm961, %v932, 0
    %v1042 = vsel %vm961, %v933, 0
    %1044 = vmatpush.msra.mxu0 0.0
    %1045 = vmatpush.msra.mxu0 0.0
    %1046 = vmatpush.msra.mxu0 0.0
    %1047 = vmatpush.msra.mxu0 0.0
    %1048 = vmatpush.msra.mxu0 0.0
    %1049 = vmatpush.msra.mxu0 0.0
    %1050 = vmatpush.msra.mxu0 0.0
    %1051 = vmatpush.msra.mxu0 0.0
    %1052 = vmatpush.msra.mxu0 0.0
    %1053 = vmatpush.msra.mxu0 0.0
    %1054 = vmatpush.msra.mxu0 0.0
    %1055 = vmatpush.msra.mxu0 0.0
    %1056 = vmatpush.msra.mxu0 0.0
    %1057 = vmatpush.msra.mxu0 0.0
    %1058 = vmatpush.msra.mxu0 %v936
    %1059 = vmatpush.msra.mxu0 %v934
    %1060 = vmatmul.f32.gmra.mxu0 %v1033
    %v1061 = vpop.f32.mrf.mxu0
    %v1062 = vadd.f32 %v992, %v1061
    %1063 = vmatmul.f32.gmra.mxu0 %v1036
    %v1064 = vpop.f32.mrf.mxu0
    %v1065 = vadd.f32 %v995, %v1064
    %1066 = vmatmul.f32.gmra.mxu0 %v1039
    %v1067 = vpop.f32.mrf.mxu0
    %v1068 = vadd.f32 %v998, %v1067
    %1069 = vmatmul.f32.gmra.mxu0 %v1042
    %v1070 = vpop.f32.mrf.mxu0
    %v1071 = vadd.f32 %v1001, %v1070
    %1072 = vdwg.mxu0
    %1073 = vmatpush.msra.mxu0 0.0
    %1074 = vmatpush.msra.mxu0 0.0
    %1075 = vmatpush.msra.mxu0 0.0
    %1076 = vmatpush.msra.mxu0 0.0
    %1077 = vmatpush.msra.mxu0 0.0
    %1078 = vmatpush.msra.mxu0 0.0
    %1079 = vmatpush.msra.mxu0 0.0
    %1080 = vmatpush.msra.mxu0 0.0
    %1081 = vmatpush.msra.mxu0 0.0
    %1082 = vmatpush.msra.mxu0 0.0
    %1083 = vmatpush.msra.mxu0 0.0
    %1084 = vmatpush.msra.mxu0 0.0
    %1085 = vmatpush.msra.mxu0 0.0
    %1086 = vmatpush.msra.mxu0 0.0
    %1087 = vmatpush.msra.mxu0 %v937
    %1088 = vmatpush.msra.mxu0 %v935
    %1089 = vmatmul.f32.gmra.mxu0 %v1033
    %v1090 = vpop.f32.mrf.mxu0
    %v1091 = vadd.f32 %v1021, %v1090
    %1092 = vmatmul.f32.gmra.mxu0 %v1036
    %v1093 = vpop.f32.mrf.mxu0
    %v1094 = vadd.f32 %v1024, %v1093
    %1095 = vmatmul.f32.gmra.mxu0 %v1039
    %v1096 = vpop.f32.mrf.mxu0
    %v1097 = vadd.f32 %v1027, %v1096
    %1098 = vmatmul.f32.gmra.mxu0 %v1042
    %v1099 = vpop.f32.mrf.mxu0
    %v1100 = vadd.f32 %v1030, %v1099
    %1101 = vdwg.mxu0
    %s1102 = scalar_lea.vmem %s1, 64
    %v1103 = vld [vmem:[%s1102] sm:$0xff]
    %v1104 = vld [vmem:[%s1102 + $0x8] sm:$0xff]
    %v1105 = vld [vmem:[%s1102 + $0x10] sm:$0xff]
    %v1106 = vld [vmem:[%s1102 + $0x18] sm:$0xff]
    %1107 = vrot.lane.b32.xlu0 %v934, 116
    %v1108 = vpop.permute.xlu0 %1107
    %1109 = vrot.lane.b32.xlu0 %v935, 116
    %v1110 = vpop.permute.xlu0 %1109
    %1111 = vrot.lane.b32.xlu0 %v936, 116
    %v1112 = vpop.permute.xlu0 %1111
    %1113 = vrot.lane.b32.xlu0 %v937, 116
    %v1114 = vpop.permute.xlu0 %1113
    %v1115 = vsel %vm658, %v1108, %v1110
    %v1116 = vsel %vm658, %v1112, %v1114
    %v1122 = vsel %vm961, %v1103, 0
    %v1125 = vsel %vm961, %v1104, 0
    %v1128 = vsel %vm961, %v1105, 0
    %v1131 = vsel %vm961, %v1106, 0
    %1133 = vmatpush.msra.mxu0 0.0
    %1134 = vmatpush.msra.mxu0 0.0
    %1135 = vmatpush.msra.mxu0 0.0
    %1136 = vmatpush.msra.mxu0 0.0
    %1137 = vmatpush.msra.mxu0 0.0
    %1138 = vmatpush.msra.mxu0 0.0
    %1139 = vmatpush.msra.mxu0 0.0
    %1140 = vmatpush.msra.mxu0 0.0
    %1141 = vmatpush.msra.mxu0 0.0
    %1142 = vmatpush.msra.mxu0 0.0
    %1143 = vmatpush.msra.mxu0 0.0
    %1144 = vmatpush.msra.mxu0 0.0
    %1145 = vmatpush.msra.mxu0 0.0
    %1146 = vmatpush.msra.mxu0 0.0
    %1147 = vmatpush.msra.mxu0 %v1116
    %1148 = vmatpush.msra.mxu0 %v1115
    %1149 = vmatmul.f32.gmra.mxu0 %v1122
    %v1150 = vpop.f32.mrf.mxu0
    %v1151 = vadd.f32 0.0, %v1150
    %1152 = vmatmul.f32.gmra.mxu0 %v1125
    %v1153 = vpop.f32.mrf.mxu0
    %v1154 = vadd.f32 0.0, %v1153
    %1155 = vmatmul.f32.gmra.mxu0 %v1128
    %v1156 = vpop.f32.mrf.mxu0
    %v1157 = vadd.f32 0.0, %v1156
    %1158 = vmatmul.f32.gmra.mxu0 %v1131
    %v1159 = vpop.f32.mrf.mxu0
    %v1160 = vadd.f32 0.0, %v1159
    %1161 = vdwg.mxu0
    %1162 = vmatpush.msra.mxu0 0.0
    %1163 = vmatpush.msra.mxu0 0.0
    %1164 = vmatpush.msra.mxu0 0.0
    %1165 = vmatpush.msra.mxu0 0.0
    %1166 = vmatpush.msra.mxu0 0.0
    %1167 = vmatpush.msra.mxu0 0.0
    %1168 = vmatpush.msra.mxu0 0.0
    %1169 = vmatpush.msra.mxu0 0.0
    %1170 = vmatpush.msra.mxu0 0.0
    %1171 = vmatpush.msra.mxu0 0.0
    %1172 = vmatpush.msra.mxu0 0.0
    %1173 = vmatpush.msra.mxu0 0.0
    %1174 = vmatpush.msra.mxu0 0.0
    %1175 = vmatpush.msra.mxu0 0.0
    %1176 = vmatpush.msra.mxu0 %v1114
    %1177 = vmatpush.msra.mxu0 %v1110
    %1178 = vmatmul.f32.gmra.mxu0 %v1122
    %v1179 = vpop.f32.mrf.mxu0
    %v1180 = vadd.f32 0.0, %v1179
    %1181 = vmatmul.f32.gmra.mxu0 %v1125
    %v1182 = vpop.f32.mrf.mxu0
    %v1183 = vadd.f32 0.0, %v1182
    %1184 = vmatmul.f32.gmra.mxu0 %v1128
    %v1185 = vpop.f32.mrf.mxu0
    %v1186 = vadd.f32 0.0, %v1185
    %1187 = vmatmul.f32.gmra.mxu0 %v1131
    %v1188 = vpop.f32.mrf.mxu0
    %v1189 = vadd.f32 0.0, %v1188
    %1190 = vdwg.mxu0
    %v1191 = vadd.f32 %v1062, %v1151
    %v1192 = vadd.f32 %v1091, %v1180
    %v1193 = vadd.f32 %v1065, %v1154
    %v1194 = vadd.f32 %v1094, %v1183
    %v1195 = vadd.f32 %v1068, %v1157
    %v1196 = vadd.f32 %v1097, %v1186
    %v1197 = vadd.f32 %v1071, %v1160
    %v1198 = vadd.f32 %v1100, %v1189
    %s1199 = scalar_lea.vmem %s1, 96
    %v1200 = vld [vmem:[%s1199] sm:$0xff]
    %v1201 = vld [vmem:[%s1199 + $0x8] sm:$0xff]
    %v1202 = vld [vmem:[%s1199 + $0x10] sm:$0xff]
    %v1203 = vld [vmem:[%s1199 + $0x18] sm:$0xff]
    %1204 = vrot.lane.b32.xlu0 %v934, 115
    %v1205 = vpop.permute.xlu0 %1204
    %1206 = vrot.lane.b32.xlu0 %v935, 115
    %v1207 = vpop.permute.xlu0 %1206
    %1208 = vrot.lane.b32.xlu0 %v936, 115
    %v1209 = vpop.permute.xlu0 %1208
    %1210 = vrot.lane.b32.xlu0 %v937, 115
    %v1211 = vpop.permute.xlu0 %1210
    %v1212 = vsel %vm769, %v1205, %v1207
    %v1213 = vsel %vm769, %v1209, %v1211
    %v1219 = vsel %vm961, %v1200, 0
    %v1222 = vsel %vm961, %v1201, 0
    %v1225 = vsel %vm961, %v1202, 0
    %v1228 = vsel %vm961, %v1203, 0
    %1230 = vmatpush.msra.mxu0 0.0
    %1231 = vmatpush.msra.mxu0 0.0
    %1232 = vmatpush.msra.mxu0 0.0
    %1233 = vmatpush.msra.mxu0 0.0
    %1234 = vmatpush.msra.mxu0 0.0
    %1235 = vmatpush.msra.mxu0 0.0
    %1236 = vmatpush.msra.mxu0 0.0
    %1237 = vmatpush.msra.mxu0 0.0
    %1238 = vmatpush.msra.mxu0 0.0
    %1239 = vmatpush.msra.mxu0 0.0
    %1240 = vmatpush.msra.mxu0 0.0
    %1241 = vmatpush.msra.mxu0 0.0
    %1242 = vmatpush.msra.mxu0 0.0
    %1243 = vmatpush.msra.mxu0 0.0
    %1244 = vmatpush.msra.mxu0 %v1213
    %1245 = vmatpush.msra.mxu0 %v1212
    %1246 = vmatmul.f32.gmra.mxu0 %v1219
    %v1247 = vpop.f32.mrf.mxu0
    %v1248 = vadd.f32 0.0, %v1247
    %1249 = vmatmul.f32.gmra.mxu0 %v1222
    %v1250 = vpop.f32.mrf.mxu0
    %v1251 = vadd.f32 0.0, %v1250
    %1252 = vmatmul.f32.gmra.mxu0 %v1225
    %v1253 = vpop.f32.mrf.mxu0
    %v1254 = vadd.f32 0.0, %v1253
    %1255 = vmatmul.f32.gmra.mxu0 %v1228
    %v1256 = vpop.f32.mrf.mxu0
    %v1257 = vadd.f32 0.0, %v1256
    %1258 = vdwg.mxu0
    %1259 = vmatpush.msra.mxu0 0.0
    %1260 = vmatpush.msra.mxu0 0.0
    %1261 = vmatpush.msra.mxu0 0.0
    %1262 = vmatpush.msra.mxu0 0.0
    %1263 = vmatpush.msra.mxu0 0.0
    %1264 = vmatpush.msra.mxu0 0.0
    %1265 = vmatpush.msra.mxu0 0.0
    %1266 = vmatpush.msra.mxu0 0.0
    %1267 = vmatpush.msra.mxu0 0.0
    %1268 = vmatpush.msra.mxu0 0.0
    %1269 = vmatpush.msra.mxu0 0.0
    %1270 = vmatpush.msra.mxu0 0.0
    %1271 = vmatpush.msra.mxu0 0.0
    %1272 = vmatpush.msra.mxu0 0.0
    %1273 = vmatpush.msra.mxu0 %v1211
    %1274 = vmatpush.msra.mxu0 %v1207
    %1275 = vmatmul.f32.gmra.mxu0 %v1219
    %v1276 = vpop.f32.mrf.mxu0
    %v1277 = vadd.f32 0.0, %v1276
    %1278 = vmatmul.f32.gmra.mxu0 %v1222
    %v1279 = vpop.f32.mrf.mxu0
    %v1280 = vadd.f32 0.0, %v1279
    %1281 = vmatmul.f32.gmra.mxu0 %v1225
    %v1282 = vpop.f32.mrf.mxu0
    %v1283 = vadd.f32 0.0, %v1282
    %1284 = vmatmul.f32.gmra.mxu0 %v1228
    %v1285 = vpop.f32.mrf.mxu0
    %v1286 = vadd.f32 0.0, %v1285
    %1287 = vdwg.mxu0
    %v1288 = vadd.f32 %v1191, %v1248
    %v1289 = vadd.f32 %v1192, %v1277
    %v1290 = vadd.f32 %v1193, %v1251
    %v1291 = vadd.f32 %v1194, %v1280
    %v1292 = vadd.f32 %v1195, %v1254
    %v1293 = vadd.f32 %v1196, %v1283
    %v1294 = vadd.f32 %v1197, %v1257
    %v1295 = vadd.f32 %v1198, %v1286
    %v1296 = vld [vmem:[%s2] sm:$0xff]
    %v1297 = vld [vmem:[%s2 + $0x8] sm:$0xff]
    %v1298 = vld [vmem:[%s2 + $0x10] sm:$0xff]
    %v1299 = vld [vmem:[%s2 + $0x18] sm:$0xff]
    %1301 = vset.pattern.permute.xlu0 0
    %1302 = vperm.xlu0 %1301, %v1296
    %v1303 = vpop.permute.xlu0 %1302
    %1306 = vset.pattern.permute.xlu0 0
    %1307 = vperm.xlu0 %1306, %v1297
    %v1308 = vpop.permute.xlu0 %1307
    %1311 = vset.pattern.permute.xlu0 0
    %1312 = vperm.xlu0 %1311, %v1298
    %v1313 = vpop.permute.xlu0 %1312
    %1316 = vset.pattern.permute.xlu0 0
    %1317 = vperm.xlu0 %1316, %v1299
    %v1318 = vpop.permute.xlu0 %1317
    %v1320 = vadd.f32 %v1288, %v1303
    %v1321 = vadd.f32 %v1289, %v1303
    %v1322 = vadd.f32 %v1290, %v1308
    %v1323 = vadd.f32 %v1291, %v1308
    %v1324 = vadd.f32 %v1292, %v1313
    %v1325 = vadd.f32 %v1293, %v1313
    %v1326 = vadd.f32 %v1294, %v1318
    %v1327 = vadd.f32 %v1295, %v1318
    %v1328 = vmul.f32 %v1320, 0.5
    %v1329 = vmul.f32 %v1321, 0.5
    %v1330 = vmul.f32 %v1322, 0.5
    %v1331 = vmul.f32 %v1323, 0.5
    %v1332 = vmul.f32 %v1324, 0.5
    %v1333 = vmul.f32 %v1325, 0.5
    %v1334 = vmul.f32 %v1326, 0.5
    %v1335 = vmul.f32 %v1327, 0.5
    %v1336 = vmul.f32 %v1320, %v1320
    %v1337 = vmul.f32 %v1321, %v1321
    %v1338 = vmul.f32 %v1322, %v1322
    %v1339 = vmul.f32 %v1323, %v1323
    %v1340 = vmul.f32 %v1324, %v1324
    %v1341 = vmul.f32 %v1325, %v1325
    %v1342 = vmul.f32 %v1326, %v1326
    %v1343 = vmul.f32 %v1327, %v1327
    %v1344 = vmul.f32 %v1336, %v1320
    %v1345 = vmul.f32 %v1337, %v1321
    %v1346 = vmul.f32 %v1338, %v1322
    %v1347 = vmul.f32 %v1339, %v1323
    %v1348 = vmul.f32 %v1340, %v1324
    %v1349 = vmul.f32 %v1341, %v1325
    %v1350 = vmul.f32 %v1342, %v1326
    %v1351 = vmul.f32 %v1343, %v1327
    %v1352 = vmul.f32 %v1344, 0.044715
    %v1353 = vmul.f32 %v1345, 0.044715
    %v1354 = vmul.f32 %v1346, 0.044715
    %v1355 = vmul.f32 %v1347, 0.044715
    %v1356 = vmul.f32 %v1348, 0.044715
    %v1357 = vmul.f32 %v1349, 0.044715
    %v1358 = vmul.f32 %v1350, 0.044715
    %v1359 = vmul.f32 %v1351, 0.044715
    %v1360 = vadd.f32 %v1320, %v1352
    %v1361 = vadd.f32 %v1321, %v1353
    %v1362 = vadd.f32 %v1322, %v1354
    %v1363 = vadd.f32 %v1323, %v1355
    %v1364 = vadd.f32 %v1324, %v1356
    %v1365 = vadd.f32 %v1325, %v1357
    %v1366 = vadd.f32 %v1326, %v1358
    %v1367 = vadd.f32 %v1327, %v1359
    %v1368 = vmul.f32 %v1360, 0.7978846
    %v1369 = vmul.f32 %v1361, 0.7978846
    %v1370 = vmul.f32 %v1362, 0.7978846
    %v1371 = vmul.f32 %v1363, 0.7978846
    %v1372 = vmul.f32 %v1364, 0.7978846
    %v1373 = vmul.f32 %v1365, 0.7978846
    %v1374 = vmul.f32 %v1366, 0.7978846
    %v1375 = vmul.f32 %v1367, 0.7978846
    %v1376 = vtanh.pop %v1368
    %v1377 = vtanh.pop %v1369
    %v1378 = vtanh.pop %v1370
    %v1379 = vtanh.pop %v1371
    %v1380 = vtanh.pop %v1372
    %v1381 = vtanh.pop %v1373
    %v1382 = vtanh.pop %v1374
    %v1383 = vtanh.pop %v1375
    %v1384 = vadd.f32 %v1376, 1.0
    %v1385 = vadd.f32 %v1377, 1.0
    %v1386 = vadd.f32 %v1378, 1.0
    %v1387 = vadd.f32 %v1379, 1.0
    %v1388 = vadd.f32 %v1380, 1.0
    %v1389 = vadd.f32 %v1381, 1.0
    %v1390 = vadd.f32 %v1382, 1.0
    %v1391 = vadd.f32 %v1383, 1.0
    %v1392 = vmul.f32 %v1328, %v1384
    %v1393 = vmul.f32 %v1329, %v1385
    %v1394 = vmul.f32 %v1330, %v1386
    %v1395 = vmul.f32 %v1331, %v1387
    %v1396 = vmul.f32 %v1332, %v1388
    %v1397 = vmul.f32 %v1333, %v1389
    %v1398 = vmul.f32 %v1334, %v1390
    %v1399 = vmul.f32 %v1335, %v1391
    %1400 = vst [vmem:[%s9] sm:$0xff] %v1392
    %1401 = vst.msk [vmem:[%s9 + $0x8] sm:$0xff] %vm961, %v1393
    %1402 = vst [vmem:[%s9 + $0x10] sm:$0xff] %v1394
    %1403 = vst.msk [vmem:[%s9 + $0x18] sm:$0xff] %vm961, %v1395
    %1404 = vst [vmem:[%s9 + $0x20] sm:$0xff] %v1396
    %1405 = vst.msk [vmem:[%s9 + $0x28] sm:$0xff] %vm961, %v1397
    %1406 = vst [vmem:[%s9 + $0x30] sm:$0xff] %v1398
    %1407 = vst.msk [vmem:[%s9 + $0x38] sm:$0xff] %vm961, %v1399
    // Predicated region
    $region22: #{model_forward.2} parent=1 // pred_check
      _
    $region23: #{model_forward.2} parent=1 // pred_check_branch
      %1409 = sbr.rel (0) target = $region25
    $region24: #{model_forward.2} parent=1 // pred_region
      _
    $region25: #{model_forward.2} parent=1 // pred_fallthru
      _
    // Predicated region
    $region26: #{model_forward.2} parent=1 // pred_check
      _
    $region27: #{model_forward.2} parent=1 // pred_check_branch
      %1411 = sbr.rel (0) target = $region29
    $region28: #{model_forward.2} parent=1 // pred_region
      _
    $region29: #{model_forward.2} parent=1 // pred_fallthru
      _
    // Predicated region
    $region30: #{model_forward.2} parent=1 // pred_check
      _
    $region31: #{model_forward.2} parent=1 // pred_check_branch
      %1413 = sbr.rel (0) target = $region33
    $region32: #{model_forward.2} parent=1 // pred_region
      _
    $region33: #{model_forward.2} parent=1 // pred_fallthru
      _
    // Predicated region
    $region34: #{model_forward.2} parent=1 // pred_check
      _
    $region35: #{model_forward.2} parent=1 // pred_check_branch
      %1415 = sbr.rel (0) target = $region37
    $region36: #{model_forward.2} parent=1 // pred_region
      _
    $region37: #{model_forward.2} parent=1 // pred_fallthru
      _

</llo_original>
